<compile_context>
chip_gen: v7x
topology: tpu7x:2x2x1
jax: 0.10.0
libtpu: 0.0.40
codegen_flags: <defaults>
</compile_context>

<pallas_src>
import jax
import jax.numpy as jnp
from jax import lax
from jax.experimental import pallas as pl
from jax.experimental.pallas import tpu as pltpu


def cam_kernel(gamma_ref, x_ref, out_ref):
    # gamma_ref: SMEM (1,) f32
    # x_ref / out_ref: VMEM block (C, HWp) in the input dtype (batch squeezed)
    x = x_ref[...]  # (C, HWp), native dtype

    # energy = X @ X^T, contracting the spatial (lane) axis of both operands.
    energy = lax.dot_general(
        x, x, (((1,), (1,)), ((), ())),
        preferred_element_type=jnp.float32,
        precision=lax.Precision.HIGHEST,
    )  # (C, C) f32

    # softmax(rowmax(E) - E) == exp(rowmin(E) - E) / sum  (stable, one less pass)
    e_min = jnp.min(energy, axis=-1, keepdims=True)
    e = jnp.exp(e_min - energy)
    denom = jnp.sum(e, axis=-1, keepdims=True)
    attn = e / denom  # (C, C) f32

    # out = attn @ X
    out = lax.dot_general(
        attn.astype(x.dtype), x, (((1,), (0,)), ((), ())),
        preferred_element_type=jnp.float32,
        precision=lax.Precision.HIGHEST,
    )  # (C, HWp) f32

    gamma = gamma_ref[0]
    out_ref[...] = (gamma * out + x.astype(jnp.float32)).astype(out_ref.dtype)


def _vmem_budget_bytes(c, hwp, itemsize):
    # double-buffered in + out blocks, plus f32 working set (out + (C,C) tiles).
    io_block = c * hwp * itemsize
    f32_work = 2 * c * hwp * 4 + 4 * c * c * 4
    est = 2 * 2 * io_block + f32_work + (4 << 20)  # + headroom
    # Clamp to the v7x physical ceiling; larger working sets should stream
    # spatial tiles instead (see TODO above).
    return int(min(max(est, 32 << 20), 64 << 20))


def cam_module(x, gamma):
    """Channel attention: x (B, C, H, W); gamma: scalar parameter (shape (1,))."""
    B, C, H, W = x.shape
    HW = H * W
    HWp = ((HW + 127) // 128) * 128  # lane-align spatial dim (zero-pad)

    x_flat = x.reshape(B, C, HW)
    if HWp != HW:
        x_flat = jnp.pad(x_flat, ((0, 0), (0, 0), (0, HWp - HW)))

    gamma = jnp.asarray(gamma, jnp.float32).reshape(1)

    out_flat = pl.pallas_call(
        cam_kernel,
        out_shape=jax.ShapeDtypeStruct((B, C, HWp), x.dtype),
        grid_spec=pl.GridSpec(
            grid=(B,),
            in_specs=[
                pl.BlockSpec(memory_space=pltpu.MemorySpace.SMEM),        # gamma
                pl.BlockSpec((None, C, HWp), lambda b: (b, 0, 0)),        # x
            ],
            out_specs=pl.BlockSpec((None, C, HWp), lambda b: (b, 0, 0)),
        ),
        compiler_params=pltpu.CompilerParams(
            dimension_semantics=("parallel",),
            vmem_limit_bytes=_vmem_budget_bytes(C, HWp, x.dtype.itemsize),
        ),
    )(gamma, x_flat)

    return out_flat[:, :, :HW].reshape(B, C, H, W)


def cam_reference(x, gamma):
    """Pure-JAX reference mirroring the PyTorch CAM_Module forward (f32)."""
    B, C, H, W = x.shape
    xf = x.reshape(B, C, H * W).astype(jnp.float32)
    energy = jnp.einsum("bcn,bdn->bcd", xf, xf,
                        precision=lax.Precision.HIGHEST)
    energy_new = jnp.max(energy, axis=-1, keepdims=True) - energy
    attn = jax.nn.softmax(energy_new, axis=-1)
    out = jnp.einsum("bcd,bdn->bcn", attn, xf,
                     precision=lax.Precision.HIGHEST)
    out = jnp.asarray(gamma, jnp.float32).reshape(()) * out + xf
    return out.reshape(B, C, H, W).astype(x.dtype)


if __name__ == "__main__":
    key = jax.random.PRNGKey(0)
    B, C, H, W = 2, 4, 16, 16
    x = jax.random.normal(key, (B, C, H, W), dtype=jnp.float32)

    # gamma is initialized to zero in the PyTorch module; use a nonzero value
    # so the attention path actually contributes to the output.
    gamma = jnp.array([0.5], dtype=jnp.float32)

    # Test 1: lane-aligned spatial dims (HW = 256).
    ref1 = cam_reference(x, gamma)
    out1 = jax.block_until_ready(cam_module(x, gamma))
    assert out1.shape == (B, C, H, W)
    assert jnp.allclose(out1, ref1, atol=2e-3, rtol=2e-3), \
        float(jnp.max(jnp.abs(out1 - ref1)))

    # Test 2: non-lane-aligned spatial dims exercise the HW -> 128 padding path.
    x2 = jax.random.normal(jax.random.PRNGKey(1), (1, 8, 13, 13), jnp.float32)
    ref2 = cam_reference(x2, gamma)
    out2 = jax.block_until_ready(cam_module(x2, gamma))
    assert jnp.allclose(out2, ref2, atol=2e-3, rtol=2e-3), \
        float(jnp.max(jnp.abs(out2 - ref2)))

    # Test 3: gamma = 0 (the module's init value) -> output equals the input.
    out3 = jax.block_until_ready(cam_module(x, jnp.zeros((1,), jnp.float32)))
    assert jnp.allclose(out3, x, atol=1e-5, rtol=1e-5)

    print("KERNEL_OK")
</pallas_src>

<mosaic_0001>
module attributes {stable_mosaic.version = 11 : i64} {
  func.func @cam_kernel(%arg0: i32, %arg1: memref<1xf32, #tpu.memory_space<smem>>, %arg2: memref<1x4x256xf32, #tpu.memory_space<vmem>>, %arg3: memref<1x4x256xf32, #tpu.memory_space<vmem>>) attributes {dimension_semantics = [#tpu.dimension_semantics<parallel>], iteration_bounds = array<i64: 2>, scalar_prefetch = 0 : i64, scratch_operands = 0 : i64, tpu.core_type = #tpu.core_type<tc>, window_params = [{transform_indices = @transform_0, window_bounds = array<i64: 1>}, {transform_indices = @transform_1, window_bounds = array<i64: 1, 4, 256>}, {transform_indices = @transform_2, window_bounds = array<i64: 1, 4, 256>}]} {
    %c0 = arith.constant 0 : index
    %c0_0 = arith.constant 0 : index
    %c0_1 = arith.constant 0 : index
    %0 = vector.load %arg2[%c0, %c0_0, %c0_1] : memref<1x4x256xf32, #tpu.memory_space<vmem>>, vector<1x4x256xf32>
    %1 = vector.shape_cast %0 : vector<1x4x256xf32> to vector<4x256xf32>
    %cst = arith.constant dense<0.000000e+00> : vector<4x4xf32>
    %2 = tpu.matmul %1, %1, %cst {dimension_numbers = #tpu.dot_dimension_numbers<[1], [1], [0], [0], [0, 0, 1, 0], [], []>, precision = #tpu.contract_precision<fp32>} : vector<4x256xf32>, vector<4x256xf32>, vector<4x4xf32> -> vector<4x4xf32>
    %cst_2 = arith.constant dense<0x7F800000> : vector<4xf32>
    %3 = vector.multi_reduction <minimumf>, %2, %cst_2 [1] : vector<4x4xf32> to vector<4xf32>
    %4 = vector.shape_cast %3 : vector<4xf32> to vector<4x1xf32>
    %5 = vector.broadcast %4 : vector<4x1xf32> to vector<4x4xf32>
    %6 = arith.subf %5, %2 : vector<4x4xf32>
    %7 = math.exp %6 : vector<4x4xf32>
    %cst_3 = arith.constant dense<0.000000e+00> : vector<4xf32>
    %8 = vector.multi_reduction <add>, %7, %cst_3 [1] : vector<4x4xf32> to vector<4xf32>
    %9 = vector.shape_cast %8 : vector<4xf32> to vector<4x1xf32>
    %10 = vector.broadcast %9 : vector<4x1xf32> to vector<4x4xf32>
    %11 = arith.divf %7, %10 : vector<4x4xf32>
    %cst_4 = arith.constant dense<0.000000e+00> : vector<4x256xf32>
    %12 = tpu.matmul %11, %1, %cst_4 {dimension_numbers = #tpu.dot_dimension_numbers<[1], [0], [0], [1], [0, 0, 1, 1], [], []>, precision = #tpu.contract_precision<fp32>} : vector<4x4xf32>, vector<4x256xf32>, vector<4x256xf32> -> vector<4x256xf32>
    %c0_5 = arith.constant 0 : index
    %13 = memref.load %arg1[%c0_5] : memref<1xf32, #tpu.memory_space<smem>>
    %14 = vector.broadcast %13 : f32 to vector<4x256xf32>
    %15 = arith.mulf %14, %12 : vector<4x256xf32>
    %16 = arith.addf %15, %1 : vector<4x256xf32>
    %c0_6 = arith.constant 0 : index
    %c0_7 = arith.constant 0 : index
    %c0_8 = arith.constant 0 : index
    %17 = vector.load %arg3[%c0_6, %c0_7, %c0_8] : memref<1x4x256xf32, #tpu.memory_space<vmem>>, vector<1x4x256xf32>
    %18 = vector.shape_cast %17 : vector<1x4x256xf32> to vector<4x256xf32>
    %19 = vector.shape_cast %16 : vector<4x256xf32> to vector<1x4x256xf32>
    tpu.vector_store %arg3[%c0_6, %c0_7, %c0_8], %19 {strides = array<i32>} : memref<1x4x256xf32, #tpu.memory_space<vmem>>, vector<1x4x256xf32>,
    return
  }
  func.func @transform_0(%arg0: i32) -> i32 {
    %c0_i32 = arith.constant 0 : i32
    %c0_i32_0 = arith.constant 0 : i32
    return %c0_i32 : i32
  }
  func.func @transform_1(%arg0: i32) -> (i32, i32, i32) {
    %c0_i32 = arith.constant 0 : i32
    %c0_i32_0 = arith.constant 0 : i32
    %c0_i32_1 = arith.constant 0 : i32
    return %arg0, %c0_i32, %c0_i32_0 : i32, i32, i32
  }
  func.func @transform_2(%arg0: i32) -> (i32, i32, i32) {
    %c0_i32 = arith.constant 0 : i32
    %c0_i32_0 = arith.constant 0 : i32
    %c0_i32_1 = arith.constant 0 : i32
    return %arg0, %c0_i32, %c0_i32_0 : i32, i32, i32
  }
}

</mosaic_0001>

<llo_original>
// kernel: tpu_custom_call.1
$region0: #{tpu_custom_call.1}
  #allocation0 [shape = 'u32[]', space=smem, size = 0x4, offset = 0x4, fixed_abs, tag = 'smem constant byte address 0x4 - core index']
  #allocation1 [shape = 'u32[144,128]{1,0:T(1,128)}', space=vmem, size = 0x12000, scoped, tag = 'internal scratch']
  #allocation2 [shape = 'f32[1]{0:T(128)S(6)}', space=smem, size = 0x200, scoped, tag = 'scoped memory for tpu_custom_call.1']
  %s0 = inlined_call_operand.<no memory space> [shape: f32[1], index: 0, kind: input, shape index: {}]
  %s1 = inlined_call_operand.hbm [shape: f32[2,4,256], index: 1, kind: input, shape index: {}]
  %s2 = inlined_call_operand.hbm [shape: f32[2,4,256], index: 2, kind: output, shape index: {}]
  %s3 = sld [smem:[#allocation0]]
  $region45: #{tpu_custom_call.1} parent=0
    _
  %s5 = ssub.s32 1, %s3
  %s6 = scalar_select 0, %s5, %s3
  %7 = sst [smem:[#allocation2]] %s0
  $region1: #{tpu_custom_call.1} parent=0
    #allocation3 [shape = 'u8[8192]{0}', space=vmem, size = 0x2000, scoped, tag = 'input window, operand 1']
    #allocation4 [shape = 's32[2]{0}', space=sflag, size = 0x8, scoped, tag = 'scoped memory for tpu_custom_call.1']
    #allocation5 [shape = 's32[2]{0}', space=sflag, size = 0x8, scoped, tag = 'scoped memory for tpu_custom_call.1']
    #allocation6 [shape = 'u8[8192]{0}', space=vmem, size = 0x2000, scoped, tag = 'output window, operand 0']
    %8 = vsyncpa [#allocation4], 0
    %s9 = scalar_lea.sflag [#allocation4], 1
    %10 = vsyncpa %s9, 0
    %11 = vsyncpa [#allocation5], 0
    %s12 = scalar_lea.sflag [#allocation5], 1
    %13 = vsyncpa %s12, 0
    loop: start=0, step=1, limit=4
    $region2: #{tpu_custom_call.1} parent=1 // loop_pre_header
      _
    $region3: #{tpu_custom_call.1} parent=1 // loop_header
      %s15 = sphi 0, %s19
      %p16 = scmp.ge.s32.totalorder %s15, 4
      %s23 = sphi 0, %s23
      %s25 = sphi 0, %s23
      %s26 = sphi 0, %s25
      %s40 = sphi 0, %s26
      %s46 = sphi 0, %s48
      %s49 = sphi 0, %s46
      %s50 = sphi 0, %s49
      %s66 = sphi 0, %s50
      %s72 = sphi 0, %s74
      %s75 = sphi 0, %s72
      %s76 = sphi 0, %s75
      %s92 = sphi 0, %s76
    $region4: #{tpu_custom_call.1} parent=1 // loop_header_branch
      %18 = sbr.rel (%p16) target = $region8
    $region5: #{tpu_custom_call.1} parent=1 // loop_body
      %s20 = ssub.s32 %s15, 1
      %s21 = ssub.s32 %s15, 2
      %s22 = sadd.s32 %s15, 1
      %s24 = sadd.s32 %s23, 1
      %p27 = scmp.eq.s32.totalorder %s15, 1
      %p28 = scmp.ne.s32.totalorder %s23, %s25
      %p29 = scmp.eq.s32.totalorder %s15, 0
      %p30 = por %p28, %p29
      %p31 = scmp.ne.s32.totalorder %s23, %s25
      %p32 = scmp.eq.s32.totalorder %s20, 1
      %p33 = por %p31, %p32
      %p34 = scmp.ne.s32.totalorder %s25, %s26
      %p35 = scmp.eq.s32.totalorder %s20, 0
      %p36 = por %p34, %p35
      %p37 = scmp.ne.s32.totalorder %s25, %s26
      %p38 = scmp.eq.s32.totalorder %s21, 1
      %p39 = por %p37, %p38
      %p41 = scmp.ne.s32.totalorder %s26, %s40
      %p42 = scmp.eq.s32.totalorder %s21, 0
      %p43 = por %p41, %p42
      %s44 = ssub.s32 %s15, %s22
      %p45 = scmp.eq.s32.totalorder %s44, 0
      %s47 = sadd.s32 %s46, 1
      %s48 = scalar_select %p45, %s46, %s47
      %p51 = pneg %p45
      %p52 = scmp.eq.s32.totalorder %s15, 1
      %p53 = por %p51, %p52
      %p54 = scmp.ne.s32.totalorder %s46, %s49
      %p55 = scmp.eq.s32.totalorder %s15, 0
      %p56 = por %p54, %p55
      %p57 = scmp.ne.s32.totalorder %s46, %s49
      %p58 = scmp.eq.s32.totalorder %s20, 1
      %p59 = por %p57, %p58
      %p60 = scmp.ne.s32.totalorder %s49, %s50
      %p61 = scmp.eq.s32.totalorder %s20, 0
      %p62 = por %p60, %p61
      %p63 = scmp.ne.s32.totalorder %s49, %s50
      %p64 = scmp.eq.s32.totalorder %s21, 1
      %p65 = por %p63, %p64
      %p67 = scmp.ne.s32.totalorder %s50, %s66
      %p68 = scmp.eq.s32.totalorder %s21, 0
      %p69 = por %p67, %p68
      %s70 = ssub.s32 %s15, %s22
      %p71 = scmp.eq.s32.totalorder %s70, 0
      %s73 = sadd.s32 %s72, 1
      %s74 = scalar_select %p71, %s72, %s73
      %p77 = pneg %p71
      %p78 = scmp.eq.s32.totalorder %s15, 1
      %p79 = por %p77, %p78
      %p80 = scmp.ne.s32.totalorder %s72, %s75
      %p81 = scmp.eq.s32.totalorder %s15, 0
      %p82 = por %p80, %p81
      %p83 = scmp.ne.s32.totalorder %s72, %s75
      %p84 = scmp.eq.s32.totalorder %s20, 1
      %p85 = por %p83, %p84
      %p86 = scmp.ne.s32.totalorder %s75, %s76
      %p87 = scmp.eq.s32.totalorder %s20, 0
      %p88 = por %p86, %p87
      %p89 = scmp.ne.s32.totalorder %s75, %s76
      %p90 = scmp.eq.s32.totalorder %s21, 1
      %p91 = por %p89, %p90
      %p93 = scmp.ne.s32.totalorder %s76, %s92
      %p94 = scmp.eq.s32.totalorder %s21, 0
      %p95 = por %p93, %p94
      %p96 = scmp.le.s32.totalorder 1, %s15
      %p97 = scmp.lt.s32.totalorder %s15, 3
      %p98 = pnand %p96, %p97
      %p99 = pneg %p98
      // Predicated region
      $region9: #{tpu_custom_call.1} parent=5 // pred_check
        _
      $region10: #{tpu_custom_call.1} parent=5 // pred_check_branch
        %101 = sbr.rel (%p98) target = $region12
      $region11: #{tpu_custom_call.1} parent=5 // pred_region
        %s102 = ssub.s32 %s15, 1
        // Predicated region
        $region13: #{tpu_custom_call.1} parent=11 // pred_check
          %p103 = pneg %p36
        $region14: #{tpu_custom_call.1} parent=11 // pred_check_branch
          %105 = sbr.rel (%p103) target = $region16
        $region15: #{tpu_custom_call.1} parent=11 // pred_region
          _
        $region16: #{tpu_custom_call.1} parent=11 // pred_fallthru
          _
      $region12: #{tpu_custom_call.1} parent=5 // pred_fallthru
        _
      %p106 = scmp.lt.s32.totalorder %s15, 2
      // Predicated region
      $region17: #{tpu_custom_call.1} parent=5 // pred_check
        %p107 = pneg %p106
      $region18: #{tpu_custom_call.1} parent=5 // pred_check_branch
        %109 = sbr.rel (%p107) target = $region20
      $region19: #{tpu_custom_call.1} parent=5 // pred_region
        // Predicated region
        $region21: #{tpu_custom_call.1} parent=19 // pred_check
          %p110 = pneg %p56
        $region22: #{tpu_custom_call.1} parent=19 // pred_check_branch
          %112 = sbr.rel (%p110) target = $region24
        $region23: #{tpu_custom_call.1} parent=19 // pred_region
          %s113 = sand.u32 %s46, 1
          %s114 = scalar_lea.sflag [#allocation4], %s113
          %s115 = sand.u32 %s46, 1
          %s116 = smul.addr %s115, 8
          %s117 = scalar_lea.vmem [#allocation3], %s116
          %s119 = ssub.s32 128, 128
          %120 = vsyncadd %s114, %s119
          %s121 = smul.addr %s15, 2
          %s122 = smul.addr %s121, 64
          %s123 = scalar_lea.hbm %s1, %s122
          %s125 = sshll.u32 %s117, 4
          %s126 = int_to_ptr.vmem [resolvable:$true] %s125
          %128 = dma.hbm_to_vmem [thread:$0]  %s123, 128, %s126, %s114
        $region24: #{tpu_custom_call.1} parent=19 // pred_fallthru
          _
      $region20: #{tpu_custom_call.1} parent=5 // pred_fallthru
        _
      %p129 = scmp.le.s32.totalorder 1, %s15
      %p130 = scmp.lt.s32.totalorder %s15, 3
      %p131 = pnand %p129, %p130
      %p132 = pneg %p131
      // Predicated region
      $region25: #{tpu_custom_call.1} parent=5 // pred_check
        _
      $region26: #{tpu_custom_call.1} parent=5 // pred_check_branch
        %134 = sbr.rel (%p131) target = $region28
      $region27: #{tpu_custom_call.1} parent=5 // pred_region
        %s135 = ssub.s32 %s15, 1
        %s136 = sand.u32 %s49, 1
        %s137 = scalar_lea.sflag [#allocation4], %s136
        %s138 = sand.u32 %s49, 1
        %s139 = smul.addr %s138, 8
        %s140 = scalar_lea.vmem [#allocation3], %s139
        // Predicated region
        $region29: #{tpu_custom_call.1} parent=27 // pred_check
          %p141 = pneg %p62
        $region30: #{tpu_custom_call.1} parent=27 // pred_check_branch
          %143 = sbr.rel (%p141) target = $region32
        $region31: #{tpu_custom_call.1} parent=27 // pred_region
          %144 = dma.done %s137, 128
        $region32: #{tpu_custom_call.1} parent=27 // pred_fallthru
          _
        %p145 = pneg %p36
        %p146 = pneg %p33
        %s147 = sand.u32 %s49, 1
        %s148 = scalar_lea.sflag [#allocation4], %s147
        %s149 = sand.u32 %s49, 1
        %s150 = smul.addr %s149, 8
        %s151 = scalar_lea.vmem [#allocation3], %s150
        %p152 = pneg %p62
        %p153 = pneg %p59
        %p154 = pneg %p88
        %p155 = pneg %p85
        %s156 = sand.u32 %s75, 1
        %s157 = scalar_lea.sflag [#allocation5], %s156
        %s158 = sand.u32 %s75, 1
        %s159 = smul.addr %s158, 8
        %s160 = scalar_lea.vmem [#allocation6], %s159
        %v161 = vld [vmem:[%s140] sm:$0xff]
        %v163 = vcombine.high %v161, %v161
        %v165 = vand.u32 %v163, 4294901760
        %166 = vmatprep.subr.mxu0 %v165
        %v167 = vand.u32 %v161, 4294901760
        %168 = vmatpush1.xpose.msra.mxu0 %v167
        %169 = vmatprep.subr.mxu0 0.0
        %170 = vmatpush1.xpose.msra.mxu0 0.0
        %171 = vmatprep.subr.mxu0 0.0
        %172 = vmatpush1.xpose.msra.mxu0 0.0
        %173 = vmatprep.subr.mxu0 0.0
        %174 = vmatpush1.xpose.msra.mxu0 0.0
        %175 = vmatprep.subr.mxu0 0.0
        %176 = vmatpush1.xpose.msra.mxu0 0.0
        %177 = vmatprep.subr.mxu0 0.0
        %178 = vmatpush1.xpose.msra.mxu0 0.0
        %179 = vmatprep.subr.mxu0 0.0
        %180 = vmatpush1.xpose.msra.mxu0 0.0
        %181 = vmatprep.subr.mxu0 0.0
        %182 = vmatpush1.xpose.msra.mxu0 0.0
        %183 = vmatprep.subr.mxu0 0.0
        %184 = vmatpush1.xpose.msra.mxu0 0.0
        %185 = vmatprep.subr.mxu0 0.0
        %186 = vmatpush1.xpose.msra.mxu0 0.0
        %187 = vmatprep.subr.mxu0 0.0
        %188 = vmatpush1.xpose.msra.mxu0 0.0
        %189 = vmatprep.subr.mxu0 0.0
        %190 = vmatpush1.xpose.msra.mxu0 0.0
        %191 = vmatprep.subr.mxu0 0.0
        %192 = vmatpush1.xpose.msra.mxu0 0.0
        %193 = vmatprep.subr.mxu0 0.0
        %194 = vmatpush1.xpose.msra.mxu0 0.0
        %195 = vmatprep.subr.mxu0 0.0
        %196 = vmatpush1.xpose.msra.mxu0 0.0
        %197 = vmatprep.subr.mxu0 0.0
        %198 = vmatpush1.xpose.msra.mxu0 0.0
        %199 = vmatprep.subr.mxu0 0.0
        %200 = vmatpush1.xpose.msra.mxu0 0.0
        %201 = vmatprep.subr.mxu0 0.0
        %202 = vmatpush1.xpose.msra.mxu0 0.0
        %203 = vmatprep.subr.mxu0 0.0
        %204 = vmatpush1.xpose.msra.mxu0 0.0
        %205 = vmatprep.subr.mxu0 0.0
        %206 = vmatpush1.xpose.msra.mxu0 0.0
        %207 = vmatprep.subr.mxu0 0.0
        %208 = vmatpush1.xpose.msra.mxu0 0.0
        %209 = vmatprep.subr.mxu0 0.0
        %210 = vmatpush1.xpose.msra.mxu0 0.0
        %211 = vmatprep.subr.mxu0 0.0
        %212 = vmatpush1.xpose.msra.mxu0 0.0
        %213 = vmatprep.subr.mxu0 0.0
        %214 = vmatpush1.xpose.msra.mxu0 0.0
        %215 = vmatprep.subr.mxu0 0.0
        %216 = vmatpush1.xpose.msra.mxu0 0.0
        %217 = vmatprep.subr.mxu0 0.0
        %218 = vmatpush1.xpose.msra.mxu0 0.0
        %219 = vmatprep.subr.mxu0 0.0
        %220 = vmatpush1.xpose.msra.mxu0 0.0
        %221 = vmatprep.subr.mxu0 0.0
        %222 = vmatpush1.xpose.msra.mxu0 0.0
        %223 = vmatprep.subr.mxu0 0.0
        %224 = vmatpush1.xpose.msra.mxu0 0.0
        %225 = vmatprep.subr.mxu0 0.0
        %226 = vmatpush1.xpose.msra.mxu0 0.0
        %227 = vmatprep.subr.mxu0 0.0
        %228 = vmatpush1.xpose.msra.mxu0 0.0
        %229 = vmatprep.subr.mxu0 0.0
        %230 = vmatpush1.xpose.msra.mxu0 0.0
        %v231 = vand.u32 %v163, 4294901760
        %v232 = vsub.f32 %v163, %v231
        %v233 = vand.u32 %v232, 4294901760
        %v234 = vsub.f32 %v232, %v233
        %v235 = vand.u32 %v234, 4294901760
        %236 = vmatprep.mubr.f32.mxu0 %v235
        %v237 = vand.u32 %v161, 4294901760
        %v238 = vsub.f32 %v161, %v237
        %v239 = vand.u32 %v238, 4294901760
        %v240 = vsub.f32 %v238, %v239
        %v241 = vand.u32 %v240, 4294901760
        %242 = vmatmul.mubr.f32.gmra.mrb[0].mxu0 %v241
        %v243 = vpop.f32.mrb[0].mxu0
        %v244 = vadd.f32 0.0, %v243
        %v245 = vpop.f32.mrb[0].mxu0
        %246 = vdwg.mxu0
        %v247 = vand.u32 %v163, 4294901760
        %v248 = vsub.f32 %v163, %v247
        %v249 = vand.u32 %v248, 4294901760
        %v250 = vsub.f32 %v248, %v249
        %v251 = vand.u32 %v250, 4294901760
        %252 = vmatprep.subr.mxu0 %v251
        %v253 = vand.u32 %v161, 4294901760
        %v254 = vsub.f32 %v161, %v253
        %v255 = vand.u32 %v254, 4294901760
        %v256 = vsub.f32 %v254, %v255
        %v257 = vand.u32 %v256, 4294901760
        %258 = vmatpush1.xpose.msra.mxu0 %v257
        %259 = vmatprep.subr.mxu0 0.0
        %260 = vmatpush1.xpose.msra.mxu0 0.0
        %261 = vmatprep.subr.mxu0 0.0
        %262 = vmatpush1.xpose.msra.mxu0 0.0
        %263 = vmatprep.subr.mxu0 0.0
        %264 = vmatpush1.xpose.msra.mxu0 0.0
        %265 = vmatprep.subr.mxu0 0.0
        %266 = vmatpush1.xpose.msra.mxu0 0.0
        %267 = vmatprep.subr.mxu0 0.0
        %268 = vmatpush1.xpose.msra.mxu0 0.0
        %269 = vmatprep.subr.mxu0 0.0
        %270 = vmatpush1.xpose.msra.mxu0 0.0
        %271 = vmatprep.subr.mxu0 0.0
        %272 = vmatpush1.xpose.msra.mxu0 0.0
        %273 = vmatprep.subr.mxu0 0.0
        %274 = vmatpush1.xpose.msra.mxu0 0.0
        %275 = vmatprep.subr.mxu0 0.0
        %276 = vmatpush1.xpose.msra.mxu0 0.0
        %277 = vmatprep.subr.mxu0 0.0
        %278 = vmatpush1.xpose.msra.mxu0 0.0
        %279 = vmatprep.subr.mxu0 0.0
        %280 = vmatpush1.xpose.msra.mxu0 0.0
        %281 = vmatprep.subr.mxu0 0.0
        %282 = vmatpush1.xpose.msra.mxu0 0.0
        %283 = vmatprep.subr.mxu0 0.0
        %284 = vmatpush1.xpose.msra.mxu0 0.0
        %285 = vmatprep.subr.mxu0 0.0
        %286 = vmatpush1.xpose.msra.mxu0 0.0
        %287 = vmatprep.subr.mxu0 0.0
        %288 = vmatpush1.xpose.msra.mxu0 0.0
        %289 = vmatprep.subr.mxu0 0.0
        %290 = vmatpush1.xpose.msra.mxu0 0.0
        %291 = vmatprep.subr.mxu0 0.0
        %292 = vmatpush1.xpose.msra.mxu0 0.0
        %293 = vmatprep.subr.mxu0 0.0
        %294 = vmatpush1.xpose.msra.mxu0 0.0
        %295 = vmatprep.subr.mxu0 0.0
        %296 = vmatpush1.xpose.msra.mxu0 0.0
        %297 = vmatprep.subr.mxu0 0.0
        %298 = vmatpush1.xpose.msra.mxu0 0.0
        %299 = vmatprep.subr.mxu0 0.0
        %300 = vmatpush1.xpose.msra.mxu0 0.0
        %301 = vmatprep.subr.mxu0 0.0
        %302 = vmatpush1.xpose.msra.mxu0 0.0
        %303 = vmatprep.subr.mxu0 0.0
        %304 = vmatpush1.xpose.msra.mxu0 0.0
        %305 = vmatprep.subr.mxu0 0.0
        %306 = vmatpush1.xpose.msra.mxu0 0.0
        %307 = vmatprep.subr.mxu0 0.0
        %308 = vmatpush1.xpose.msra.mxu0 0.0
        %309 = vmatprep.subr.mxu0 0.0
        %310 = vmatpush1.xpose.msra.mxu0 0.0
        %311 = vmatprep.subr.mxu0 0.0
        %312 = vmatpush1.xpose.msra.mxu0 0.0
        %313 = vmatprep.subr.mxu0 0.0
        %314 = vmatpush1.xpose.msra.mxu0 0.0
        %315 = vmatprep.subr.mxu0 0.0
        %316 = vmatpush1.xpose.msra.mxu0 0.0
        %317 = vmatprep.subr.mxu0 0.0
        %318 = vmatpush1.xpose.msra.mxu0 0.0
        %319 = vmatprep.subr.mxu0 0.0
        %320 = vmatpush1.xpose.msra.mxu0 0.0
        %v321 = vand.u32 %v163, 4294901760
        %322 = vmatprep.mubr.f32.mxu0 %v321
        %v323 = vand.u32 %v161, 4294901760
        %324 = vmatmul.mubr.f32.gmra.mrb[0].mxu0 %v323
        %v325 = vpop.f32.mrb[0].mxu0
        %v326 = vadd.f32 %v244, %v325
        %v327 = vpop.f32.mrb[0].mxu0
        %328 = vdwg.mxu0
        %v329 = vand.u32 %v163, 4294901760
        %v330 = vsub.f32 %v163, %v329
        %331 = vmatprep.subr.mxu0 %v330
        %v332 = vand.u32 %v161, 4294901760
        %v333 = vsub.f32 %v161, %v332
        %334 = vmatpush1.xpose.msra.mxu0 %v333
        %335 = vmatprep.subr.mxu0 0.0
        %336 = vmatpush1.xpose.msra.mxu0 0.0
        %337 = vmatprep.subr.mxu0 0.0
        %338 = vmatpush1.xpose.msra.mxu0 0.0
        %339 = vmatprep.subr.mxu0 0.0
        %340 = vmatpush1.xpose.msra.mxu0 0.0
        %341 = vmatprep.subr.mxu0 0.0
        %342 = vmatpush1.xpose.msra.mxu0 0.0
        %343 = vmatprep.subr.mxu0 0.0
        %344 = vmatpush1.xpose.msra.mxu0 0.0
        %345 = vmatprep.subr.mxu0 0.0
        %346 = vmatpush1.xpose.msra.mxu0 0.0
        %347 = vmatprep.subr.mxu0 0.0
        %348 = vmatpush1.xpose.msra.mxu0 0.0
        %349 = vmatprep.subr.mxu0 0.0
        %350 = vmatpush1.xpose.msra.mxu0 0.0
        %351 = vmatprep.subr.mxu0 0.0
        %352 = vmatpush1.xpose.msra.mxu0 0.0
        %353 = vmatprep.subr.mxu0 0.0
        %354 = vmatpush1.xpose.msra.mxu0 0.0
        %355 = vmatprep.subr.mxu0 0.0
        %356 = vmatpush1.xpose.msra.mxu0 0.0
        %357 = vmatprep.subr.mxu0 0.0
        %358 = vmatpush1.xpose.msra.mxu0 0.0
        %359 = vmatprep.subr.mxu0 0.0
        %360 = vmatpush1.xpose.msra.mxu0 0.0
        %361 = vmatprep.subr.mxu0 0.0
        %362 = vmatpush1.xpose.msra.mxu0 0.0
        %363 = vmatprep.subr.mxu0 0.0
        %364 = vmatpush1.xpose.msra.mxu0 0.0
        %365 = vmatprep.subr.mxu0 0.0
        %366 = vmatpush1.xpose.msra.mxu0 0.0
        %367 = vmatprep.subr.mxu0 0.0
        %368 = vmatpush1.xpose.msra.mxu0 0.0
        %369 = vmatprep.subr.mxu0 0.0
        %370 = vmatpush1.xpose.msra.mxu0 0.0
        %371 = vmatprep.subr.mxu0 0.0
        %372 = vmatpush1.xpose.msra.mxu0 0.0
        %373 = vmatprep.subr.mxu0 0.0
        %374 = vmatpush1.xpose.msra.mxu0 0.0
        %375 = vmatprep.subr.mxu0 0.0
        %376 = vmatpush1.xpose.msra.mxu0 0.0
        %377 = vmatprep.subr.mxu0 0.0
        %378 = vmatpush1.xpose.msra.mxu0 0.0
        %379 = vmatprep.subr.mxu0 0.0
        %380 = vmatpush1.xpose.msra.mxu0 0.0
        %381 = vmatprep.subr.mxu0 0.0
        %382 = vmatpush1.xpose.msra.mxu0 0.0
        %383 = vmatprep.subr.mxu0 0.0
        %384 = vmatpush1.xpose.msra.mxu0 0.0
        %385 = vmatprep.subr.mxu0 0.0
        %386 = vmatpush1.xpose.msra.mxu0 0.0
        %387 = vmatprep.subr.mxu0 0.0
        %388 = vmatpush1.xpose.msra.mxu0 0.0
        %389 = vmatprep.subr.mxu0 0.0
        %390 = vmatpush1.xpose.msra.mxu0 0.0
        %391 = vmatprep.subr.mxu0 0.0
        %392 = vmatpush1.xpose.msra.mxu0 0.0
        %393 = vmatprep.subr.mxu0 0.0
        %394 = vmatpush1.xpose.msra.mxu0 0.0
        %395 = vmatprep.subr.mxu0 0.0
        %396 = vmatpush1.xpose.msra.mxu0 0.0
        %v397 = vand.u32 %v163, 4294901760
        %v398 = vsub.f32 %v163, %v397
        %399 = vmatprep.mubr.f32.mxu0 %v398
        %v400 = vand.u32 %v161, 4294901760
        %v401 = vsub.f32 %v161, %v400
        %402 = vmatmul.mubr.f32.gmra.mrb[0].mxu0 %v401
        %v403 = vpop.f32.mrb[0].mxu0
        %v404 = vadd.f32 %v326, %v403
        %v405 = vpop.f32.mrb[0].mxu0
        %406 = vdwg.mxu0
        %v407 = vand.u32 %v163, 4294901760
        %408 = vmatprep.subr.mxu0 %v407
        %v409 = vand.u32 %v161, 4294901760
        %410 = vmatpush1.xpose.msra.mxu0 %v409
        %411 = vmatprep.subr.mxu0 0.0
        %412 = vmatpush1.xpose.msra.mxu0 0.0
        %413 = vmatprep.subr.mxu0 0.0
        %414 = vmatpush1.xpose.msra.mxu0 0.0
        %415 = vmatprep.subr.mxu0 0.0
        %416 = vmatpush1.xpose.msra.mxu0 0.0
        %417 = vmatprep.subr.mxu0 0.0
        %418 = vmatpush1.xpose.msra.mxu0 0.0
        %419 = vmatprep.subr.mxu0 0.0
        %420 = vmatpush1.xpose.msra.mxu0 0.0
        %421 = vmatprep.subr.mxu0 0.0
        %422 = vmatpush1.xpose.msra.mxu0 0.0
        %423 = vmatprep.subr.mxu0 0.0
        %424 = vmatpush1.xpose.msra.mxu0 0.0
        %425 = vmatprep.subr.mxu0 0.0
        %426 = vmatpush1.xpose.msra.mxu0 0.0
        %427 = vmatprep.subr.mxu0 0.0
        %428 = vmatpush1.xpose.msra.mxu0 0.0
        %429 = vmatprep.subr.mxu0 0.0
        %430 = vmatpush1.xpose.msra.mxu0 0.0
        %431 = vmatprep.subr.mxu0 0.0
        %432 = vmatpush1.xpose.msra.mxu0 0.0
        %433 = vmatprep.subr.mxu0 0.0
        %434 = vmatpush1.xpose.msra.mxu0 0.0
        %435 = vmatprep.subr.mxu0 0.0
        %436 = vmatpush1.xpose.msra.mxu0 0.0
        %437 = vmatprep.subr.mxu0 0.0
        %438 = vmatpush1.xpose.msra.mxu0 0.0
        %439 = vmatprep.subr.mxu0 0.0
        %440 = vmatpush1.xpose.msra.mxu0 0.0
        %441 = vmatprep.subr.mxu0 0.0
        %442 = vmatpush1.xpose.msra.mxu0 0.0
        %443 = vmatprep.subr.mxu0 0.0
        %444 = vmatpush1.xpose.msra.mxu0 0.0
        %445 = vmatprep.subr.mxu0 0.0
        %446 = vmatpush1.xpose.msra.mxu0 0.0
        %447 = vmatprep.subr.mxu0 0.0
        %448 = vmatpush1.xpose.msra.mxu0 0.0
        %449 = vmatprep.subr.mxu0 0.0
        %450 = vmatpush1.xpose.msra.mxu0 0.0
        %451 = vmatprep.subr.mxu0 0.0
        %452 = vmatpush1.xpose.msra.mxu0 0.0
        %453 = vmatprep.subr.mxu0 0.0
        %454 = vmatpush1.xpose.msra.mxu0 0.0
        %455 = vmatprep.subr.mxu0 0.0
        %456 = vmatpush1.xpose.msra.mxu0 0.0
        %457 = vmatprep.subr.mxu0 0.0
        %458 = vmatpush1.xpose.msra.mxu0 0.0
        %459 = vmatprep.subr.mxu0 0.0
        %460 = vmatpush1.xpose.msra.mxu0 0.0
        %461 = vmatprep.subr.mxu0 0.0
        %462 = vmatpush1.xpose.msra.mxu0 0.0
        %463 = vmatprep.subr.mxu0 0.0
        %464 = vmatpush1.xpose.msra.mxu0 0.0
        %465 = vmatprep.subr.mxu0 0.0
        %466 = vmatpush1.xpose.msra.mxu0 0.0
        %467 = vmatprep.subr.mxu0 0.0
        %468 = vmatpush1.xpose.msra.mxu0 0.0
        %469 = vmatprep.subr.mxu0 0.0
        %470 = vmatpush1.xpose.msra.mxu0 0.0
        %471 = vmatprep.subr.mxu0 0.0
        %472 = vmatpush1.xpose.msra.mxu0 0.0
        %v473 = vand.u32 %v163, 4294901760
        %v474 = vsub.f32 %v163, %v473
        %v475 = vand.u32 %v474, 4294901760
        %476 = vmatprep.mubr.f32.mxu0 %v475
        %v477 = vand.u32 %v161, 4294901760
        %v478 = vsub.f32 %v161, %v477
        %v479 = vand.u32 %v478, 4294901760
        %480 = vmatmul.mubr.f32.gmra.mrb[0].mxu0 %v479
        %v481 = vpop.f32.mrb[0].mxu0
        %v482 = vadd.f32 %v404, %v481
        %v483 = vpop.f32.mrb[0].mxu0
        %484 = vdwg.mxu0
        %v485 = vand.u32 %v163, 4294901760
        %v486 = vsub.f32 %v163, %v485
        %v487 = vand.u32 %v486, 4294901760
        %488 = vmatprep.subr.mxu0 %v487
        %v489 = vand.u32 %v161, 4294901760
        %v490 = vsub.f32 %v161, %v489
        %v491 = vand.u32 %v490, 4294901760
        %492 = vmatpush1.xpose.msra.mxu0 %v491
        %493 = vmatprep.subr.mxu0 0.0
        %494 = vmatpush1.xpose.msra.mxu0 0.0
        %495 = vmatprep.subr.mxu0 0.0
        %496 = vmatpush1.xpose.msra.mxu0 0.0
        %497 = vmatprep.subr.mxu0 0.0
        %498 = vmatpush1.xpose.msra.mxu0 0.0
        %499 = vmatprep.subr.mxu0 0.0
        %500 = vmatpush1.xpose.msra.mxu0 0.0
        %501 = vmatprep.subr.mxu0 0.0
        %502 = vmatpush1.xpose.msra.mxu0 0.0
        %503 = vmatprep.subr.mxu0 0.0
        %504 = vmatpush1.xpose.msra.mxu0 0.0
        %505 = vmatprep.subr.mxu0 0.0
        %506 = vmatpush1.xpose.msra.mxu0 0.0
        %507 = vmatprep.subr.mxu0 0.0
        %508 = vmatpush1.xpose.msra.mxu0 0.0
        %509 = vmatprep.subr.mxu0 0.0
        %510 = vmatpush1.xpose.msra.mxu0 0.0
        %511 = vmatprep.subr.mxu0 0.0
        %512 = vmatpush1.xpose.msra.mxu0 0.0
        %513 = vmatprep.subr.mxu0 0.0
        %514 = vmatpush1.xpose.msra.mxu0 0.0
        %515 = vmatprep.subr.mxu0 0.0
        %516 = vmatpush1.xpose.msra.mxu0 0.0
        %517 = vmatprep.subr.mxu0 0.0
        %518 = vmatpush1.xpose.msra.mxu0 0.0
        %519 = vmatprep.subr.mxu0 0.0
        %520 = vmatpush1.xpose.msra.mxu0 0.0
        %521 = vmatprep.subr.mxu0 0.0
        %522 = vmatpush1.xpose.msra.mxu0 0.0
        %523 = vmatprep.subr.mxu0 0.0
        %524 = vmatpush1.xpose.msra.mxu0 0.0
        %525 = vmatprep.subr.mxu0 0.0
        %526 = vmatpush1.xpose.msra.mxu0 0.0
        %527 = vmatprep.subr.mxu0 0.0
        %528 = vmatpush1.xpose.msra.mxu0 0.0
        %529 = vmatprep.subr.mxu0 0.0
        %530 = vmatpush1.xpose.msra.mxu0 0.0
        %531 = vmatprep.subr.mxu0 0.0
        %532 = vmatpush1.xpose.msra.mxu0 0.0
        %533 = vmatprep.subr.mxu0 0.0
        %534 = vmatpush1.xpose.msra.mxu0 0.0
        %535 = vmatprep.subr.mxu0 0.0
        %536 = vmatpush1.xpose.msra.mxu0 0.0
        %537 = vmatprep.subr.mxu0 0.0
        %538 = vmatpush1.xpose.msra.mxu0 0.0
        %539 = vmatprep.subr.mxu0 0.0
        %540 = vmatpush1.xpose.msra.mxu0 0.0
        %541 = vmatprep.subr.mxu0 0.0
        %542 = vmatpush1.xpose.msra.mxu0 0.0
        %543 = vmatprep.subr.mxu0 0.0
        %544 = vmatpush1.xpose.msra.mxu0 0.0
        %545 = vmatprep.subr.mxu0 0.0
        %546 = vmatpush1.xpose.msra.mxu0 0.0
        %547 = vmatprep.subr.mxu0 0.0
        %548 = vmatpush1.xpose.msra.mxu0 0.0
        %549 = vmatprep.subr.mxu0 0.0
        %550 = vmatpush1.xpose.msra.mxu0 0.0
        %551 = vmatprep.subr.mxu0 0.0
        %552 = vmatpush1.xpose.msra.mxu0 0.0
        %553 = vmatprep.subr.mxu0 0.0
        %554 = vmatpush1.xpose.msra.mxu0 0.0
        %v555 = vand.u32 %v163, 4294901760
        %556 = vmatprep.mubr.f32.mxu0 %v555
        %v557 = vand.u32 %v161, 4294901760
        %558 = vmatmul.mubr.f32.gmra.mrb[0].mxu0 %v557
        %v559 = vpop.f32.mrb[0].mxu0
        %v560 = vadd.f32 %v482, %v559
        %v561 = vpop.f32.mrb[0].mxu0
        %562 = vdwg.mxu0
        %v563 = vand.u32 %v163, 4294901760
        %564 = vmatprep.subr.mxu0 %v563
        %v565 = vand.u32 %v161, 4294901760
        %566 = vmatpush1.xpose.msra.mxu0 %v565
        %567 = vmatprep.subr.mxu0 0.0
        %568 = vmatpush1.xpose.msra.mxu0 0.0
        %569 = vmatprep.subr.mxu0 0.0
        %570 = vmatpush1.xpose.msra.mxu0 0.0
        %571 = vmatprep.subr.mxu0 0.0
        %572 = vmatpush1.xpose.msra.mxu0 0.0
        %573 = vmatprep.subr.mxu0 0.0
        %574 = vmatpush1.xpose.msra.mxu0 0.0
        %575 = vmatprep.subr.mxu0 0.0
        %576 = vmatpush1.xpose.msra.mxu0 0.0
        %577 = vmatprep.subr.mxu0 0.0
        %578 = vmatpush1.xpose.msra.mxu0 0.0
        %579 = vmatprep.subr.mxu0 0.0
        %580 = vmatpush1.xpose.msra.mxu0 0.0
        %581 = vmatprep.subr.mxu0 0.0
        %582 = vmatpush1.xpose.msra.mxu0 0.0
        %583 = vmatprep.subr.mxu0 0.0
        %584 = vmatpush1.xpose.msra.mxu0 0.0
        %585 = vmatprep.subr.mxu0 0.0
        %586 = vmatpush1.xpose.msra.mxu0 0.0
        %587 = vmatprep.subr.mxu0 0.0
        %588 = vmatpush1.xpose.msra.mxu0 0.0
        %589 = vmatprep.subr.mxu0 0.0
        %590 = vmatpush1.xpose.msra.mxu0 0.0
        %591 = vmatprep.subr.mxu0 0.0
        %592 = vmatpush1.xpose.msra.mxu0 0.0
        %593 = vmatprep.subr.mxu0 0.0
        %594 = vmatpush1.xpose.msra.mxu0 0.0
        %595 = vmatprep.subr.mxu0 0.0
        %596 = vmatpush1.xpose.msra.mxu0 0.0
        %597 = vmatprep.subr.mxu0 0.0
        %598 = vmatpush1.xpose.msra.mxu0 0.0
        %599 = vmatprep.subr.mxu0 0.0
        %600 = vmatpush1.xpose.msra.mxu0 0.0
        %601 = vmatprep.subr.mxu0 0.0
        %602 = vmatpush1.xpose.msra.mxu0 0.0
        %603 = vmatprep.subr.mxu0 0.0
        %604 = vmatpush1.xpose.msra.mxu0 0.0
        %605 = vmatprep.subr.mxu0 0.0
        %606 = vmatpush1.xpose.msra.mxu0 0.0
        %607 = vmatprep.subr.mxu0 0.0
        %608 = vmatpush1.xpose.msra.mxu0 0.0
        %609 = vmatprep.subr.mxu0 0.0
        %610 = vmatpush1.xpose.msra.mxu0 0.0
        %611 = vmatprep.subr.mxu0 0.0
        %612 = vmatpush1.xpose.msra.mxu0 0.0
        %613 = vmatprep.subr.mxu0 0.0
        %614 = vmatpush1.xpose.msra.mxu0 0.0
        %615 = vmatprep.subr.mxu0 0.0
        %616 = vmatpush1.xpose.msra.mxu0 0.0
        %617 = vmatprep.subr.mxu0 0.0
        %618 = vmatpush1.xpose.msra.mxu0 0.0
        %619 = vmatprep.subr.mxu0 0.0
        %620 = vmatpush1.xpose.msra.mxu0 0.0
        %621 = vmatprep.subr.mxu0 0.0
        %622 = vmatpush1.xpose.msra.mxu0 0.0
        %623 = vmatprep.subr.mxu0 0.0
        %624 = vmatpush1.xpose.msra.mxu0 0.0
        %625 = vmatprep.subr.mxu0 0.0
        %626 = vmatpush1.xpose.msra.mxu0 0.0
        %627 = vmatprep.subr.mxu0 0.0
        %628 = vmatpush1.xpose.msra.mxu0 0.0
        %v629 = vand.u32 %v163, 4294901760
        %630 = vmatprep.mubr.f32.mxu0 %v629
        %v631 = vand.u32 %v161, 4294901760
        %632 = vmatmul.mubr.f32.gmra.mrb[0].mxu0 %v631
        %v633 = vpop.f32.mrb[0].mxu0
        %v634 = vadd.f32 %v560, %v633
        %v635 = vpop.f32.mrb[0].mxu0
        %636 = vdwg.mxu0
        %vm637 = vcmask 27648
        %v638 = vsel %vm637, %v634, inf
        %639 = vmin.xlane.f32.xlu0 %v638
        %v640 = vpop.xlane.xlu0 %639
        %v641 = vsub.f32 %v640, %v634
        %v642 = vmul.f32 %v641, 1.442695
        %v643 = vpow.pop %v642
        %v644 = vsel %vm637, %v643, 0.0
        %645 = vadd.xlane.f32.xlu0 %v644
        %v646 = vpop.xlane.xlu0 %645
        %v647 = vrcp.pop %v646
        %v648 = vmul.f32 %v643, %v647
        %vm649 = vcmask 31744
        %v651 = vsel %vm649, %v648, 0
        %vm653 = vcmask 1043456
        %v654 = vsel %vm653, %v161, 0
        %v656 = vsel %vm653, %v163, 0
        %v658 = vand.u32 %v656, 4294901760
        %659 = vmatprep.subr.mxu0 %v658
        %v660 = vand.u32 %v654, 4294901760
        %661 = vmatpush1.msra.mxu0 %v660
        %662 = vmatprep.subr.mxu0 0.0
        %663 = vmatpush1.msra.mxu0 0.0
        %664 = vmatprep.subr.mxu0 0.0
        %665 = vmatpush1.msra.mxu0 0.0
        %666 = vmatprep.subr.mxu0 0.0
        %667 = vmatpush1.msra.mxu0 0.0
        %668 = vmatprep.subr.mxu0 0.0
        %669 = vmatpush1.msra.mxu0 0.0
        %670 = vmatprep.subr.mxu0 0.0
        %671 = vmatpush1.msra.mxu0 0.0
        %672 = vmatprep.subr.mxu0 0.0
        %673 = vmatpush1.msra.mxu0 0.0
        %674 = vmatprep.subr.mxu0 0.0
        %675 = vmatpush1.msra.mxu0 0.0
        %676 = vmatprep.subr.mxu0 0.0
        %677 = vmatpush1.msra.mxu0 0.0
        %678 = vmatprep.subr.mxu0 0.0
        %679 = vmatpush1.msra.mxu0 0.0
        %680 = vmatprep.subr.mxu0 0.0
        %681 = vmatpush1.msra.mxu0 0.0
        %682 = vmatprep.subr.mxu0 0.0
        %683 = vmatpush1.msra.mxu0 0.0
        %684 = vmatprep.subr.mxu0 0.0
        %685 = vmatpush1.msra.mxu0 0.0
        %686 = vmatprep.subr.mxu0 0.0
        %687 = vmatpush1.msra.mxu0 0.0
        %688 = vmatprep.subr.mxu0 0.0
        %689 = vmatpush1.msra.mxu0 0.0
        %690 = vmatprep.subr.mxu0 0.0
        %691 = vmatpush1.msra.mxu0 0.0
        %692 = vmatprep.subr.mxu0 0.0
        %693 = vmatpush1.msra.mxu0 0.0
        %694 = vmatprep.subr.mxu0 0.0
        %695 = vmatpush1.msra.mxu0 0.0
        %696 = vmatprep.subr.mxu0 0.0
        %697 = vmatpush1.msra.mxu0 0.0
        %698 = vmatprep.subr.mxu0 0.0
        %699 = vmatpush1.msra.mxu0 0.0
        %700 = vmatprep.subr.mxu0 0.0
        %701 = vmatpush1.msra.mxu0 0.0
        %702 = vmatprep.subr.mxu0 0.0
        %703 = vmatpush1.msra.mxu0 0.0
        %704 = vmatprep.subr.mxu0 0.0
        %705 = vmatpush1.msra.mxu0 0.0
        %706 = vmatprep.subr.mxu0 0.0
        %707 = vmatpush1.msra.mxu0 0.0
        %708 = vmatprep.subr.mxu0 0.0
        %709 = vmatpush1.msra.mxu0 0.0
        %710 = vmatprep.subr.mxu0 0.0
        %711 = vmatpush1.msra.mxu0 0.0
        %712 = vmatprep.subr.mxu0 0.0
        %713 = vmatpush1.msra.mxu0 0.0
        %714 = vmatprep.subr.mxu0 0.0
        %715 = vmatpush1.msra.mxu0 0.0
        %716 = vmatprep.subr.mxu0 0.0
        %717 = vmatpush1.msra.mxu0 0.0
        %718 = vmatprep.subr.mxu0 0.0
        %719 = vmatpush1.msra.mxu0 0.0
        %720 = vmatprep.subr.mxu0 0.0
        %721 = vmatpush1.msra.mxu0 0.0
        %722 = vmatprep.subr.mxu0 0.0
        %723 = vmatpush1.msra.mxu0 0.0
        %724 = vmatprep.mubr.f32.mxu0 0.0
        %v725 = vand.u32 %v651, 4294901760
        %v726 = vsub.f32 %v651, %v725
        %v727 = vand.u32 %v726, 4294901760
        %v728 = vsub.f32 %v726, %v727
        %v729 = vand.u32 %v728, 4294901760
        %730 = vmatmul.mubr.f32.gmra.mrb[0].mxu0 %v729
        %v731 = vpop.f32.mrb[0].mxu0
        %v732 = vadd.f32 0.0, %v731
        %v733 = vpop.f32.mrb[0].mxu0
        %v734 = vadd.f32 0.0, %v733
        %735 = vdwg.mxu0
        %v736 = vand.u32 %v656, 4294901760
        %v737 = vsub.f32 %v656, %v736
        %v738 = vand.u32 %v737, 4294901760
        %v739 = vsub.f32 %v737, %v738
        %v740 = vand.u32 %v739, 4294901760
        %741 = vmatprep.subr.mxu0 %v740
        %v742 = vand.u32 %v654, 4294901760
        %v743 = vsub.f32 %v654, %v742
        %v744 = vand.u32 %v743, 4294901760
        %v745 = vsub.f32 %v743, %v744
        %v746 = vand.u32 %v745, 4294901760
        %747 = vmatpush1.msra.mxu0 %v746
        %748 = vmatprep.subr.mxu0 0.0
        %749 = vmatpush1.msra.mxu0 0.0
        %750 = vmatprep.subr.mxu0 0.0
        %751 = vmatpush1.msra.mxu0 0.0
        %752 = vmatprep.subr.mxu0 0.0
        %753 = vmatpush1.msra.mxu0 0.0
        %754 = vmatprep.subr.mxu0 0.0
        %755 = vmatpush1.msra.mxu0 0.0
        %756 = vmatprep.subr.mxu0 0.0
        %757 = vmatpush1.msra.mxu0 0.0
        %758 = vmatprep.subr.mxu0 0.0
        %759 = vmatpush1.msra.mxu0 0.0
        %760 = vmatprep.subr.mxu0 0.0
        %761 = vmatpush1.msra.mxu0 0.0
        %762 = vmatprep.subr.mxu0 0.0
        %763 = vmatpush1.msra.mxu0 0.0
        %764 = vmatprep.subr.mxu0 0.0
        %765 = vmatpush1.msra.mxu0 0.0
        %766 = vmatprep.subr.mxu0 0.0
        %767 = vmatpush1.msra.mxu0 0.0
        %768 = vmatprep.subr.mxu0 0.0
        %769 = vmatpush1.msra.mxu0 0.0
        %770 = vmatprep.subr.mxu0 0.0
        %771 = vmatpush1.msra.mxu0 0.0
        %772 = vmatprep.subr.mxu0 0.0
        %773 = vmatpush1.msra.mxu0 0.0
        %774 = vmatprep.subr.mxu0 0.0
        %775 = vmatpush1.msra.mxu0 0.0
        %776 = vmatprep.subr.mxu0 0.0
        %777 = vmatpush1.msra.mxu0 0.0
        %778 = vmatprep.subr.mxu0 0.0
        %779 = vmatpush1.msra.mxu0 0.0
        %780 = vmatprep.subr.mxu0 0.0
        %781 = vmatpush1.msra.mxu0 0.0
        %782 = vmatprep.subr.mxu0 0.0
        %783 = vmatpush1.msra.mxu0 0.0
        %784 = vmatprep.subr.mxu0 0.0
        %785 = vmatpush1.msra.mxu0 0.0
        %786 = vmatprep.subr.mxu0 0.0
        %787 = vmatpush1.msra.mxu0 0.0
        %788 = vmatprep.subr.mxu0 0.0
        %789 = vmatpush1.msra.mxu0 0.0
        %790 = vmatprep.subr.mxu0 0.0
        %791 = vmatpush1.msra.mxu0 0.0
        %792 = vmatprep.subr.mxu0 0.0
        %793 = vmatpush1.msra.mxu0 0.0
        %794 = vmatprep.subr.mxu0 0.0
        %795 = vmatpush1.msra.mxu0 0.0
        %796 = vmatprep.subr.mxu0 0.0
        %797 = vmatpush1.msra.mxu0 0.0
        %798 = vmatprep.subr.mxu0 0.0
        %799 = vmatpush1.msra.mxu0 0.0
        %800 = vmatprep.subr.mxu0 0.0
        %801 = vmatpush1.msra.mxu0 0.0
        %802 = vmatprep.subr.mxu0 0.0
        %803 = vmatpush1.msra.mxu0 0.0
        %804 = vmatprep.subr.mxu0 0.0
        %805 = vmatpush1.msra.mxu0 0.0
        %806 = vmatprep.subr.mxu0 0.0
        %807 = vmatpush1.msra.mxu0 0.0
        %808 = vmatprep.subr.mxu0 0.0
        %809 = vmatpush1.msra.mxu0 0.0
        %810 = vmatprep.mubr.f32.mxu0 0.0
        %v811 = vand.u32 %v651, 4294901760
        %812 = vmatmul.mubr.f32.gmra.mrb[0].mxu0 %v811
        %v813 = vpop.f32.mrb[0].mxu0
        %v814 = vadd.f32 %v732, %v813
        %v815 = vpop.f32.mrb[0].mxu0
        %v816 = vadd.f32 %v734, %v815
        %817 = vdwg.mxu0
        %v818 = vand.u32 %v656, 4294901760
        %v819 = vsub.f32 %v656, %v818
        %820 = vmatprep.subr.mxu0 %v819
        %v821 = vand.u32 %v654, 4294901760
        %v822 = vsub.f32 %v654, %v821
        %823 = vmatpush1.msra.mxu0 %v822
        %824 = vmatprep.subr.mxu0 0.0
        %825 = vmatpush1.msra.mxu0 0.0
        %826 = vmatprep.subr.mxu0 0.0
        %827 = vmatpush1.msra.mxu0 0.0
        %828 = vmatprep.subr.mxu0 0.0
        %829 = vmatpush1.msra.mxu0 0.0
        %830 = vmatprep.subr.mxu0 0.0
        %831 = vmatpush1.msra.mxu0 0.0
        %832 = vmatprep.subr.mxu0 0.0
        %833 = vmatpush1.msra.mxu0 0.0
        %834 = vmatprep.subr.mxu0 0.0
        %835 = vmatpush1.msra.mxu0 0.0
        %836 = vmatprep.subr.mxu0 0.0
        %837 = vmatpush1.msra.mxu0 0.0
        %838 = vmatprep.subr.mxu0 0.0
        %839 = vmatpush1.msra.mxu0 0.0
        %840 = vmatprep.subr.mxu0 0.0
        %841 = vmatpush1.msra.mxu0 0.0
        %842 = vmatprep.subr.mxu0 0.0
        %843 = vmatpush1.msra.mxu0 0.0
        %844 = vmatprep.subr.mxu0 0.0
        %845 = vmatpush1.msra.mxu0 0.0
        %846 = vmatprep.subr.mxu0 0.0
        %847 = vmatpush1.msra.mxu0 0.0
        %848 = vmatprep.subr.mxu0 0.0
        %849 = vmatpush1.msra.mxu0 0.0
        %850 = vmatprep.subr.mxu0 0.0
        %851 = vmatpush1.msra.mxu0 0.0
        %852 = vmatprep.subr.mxu0 0.0
        %853 = vmatpush1.msra.mxu0 0.0
        %854 = vmatprep.subr.mxu0 0.0
        %855 = vmatpush1.msra.mxu0 0.0
        %856 = vmatprep.subr.mxu0 0.0
        %857 = vmatpush1.msra.mxu0 0.0
        %858 = vmatprep.subr.mxu0 0.0
        %859 = vmatpush1.msra.mxu0 0.0
        %860 = vmatprep.subr.mxu0 0.0
        %861 = vmatpush1.msra.mxu0 0.0
        %862 = vmatprep.subr.mxu0 0.0
        %863 = vmatpush1.msra.mxu0 0.0
        %864 = vmatprep.subr.mxu0 0.0
        %865 = vmatpush1.msra.mxu0 0.0
        %866 = vmatprep.subr.mxu0 0.0
        %867 = vmatpush1.msra.mxu0 0.0
        %868 = vmatprep.subr.mxu0 0.0
        %869 = vmatpush1.msra.mxu0 0.0
        %870 = vmatprep.subr.mxu0 0.0
        %871 = vmatpush1.msra.mxu0 0.0
        %872 = vmatprep.subr.mxu0 0.0
        %873 = vmatpush1.msra.mxu0 0.0
        %874 = vmatprep.subr.mxu0 0.0
        %875 = vmatpush1.msra.mxu0 0.0
        %876 = vmatprep.subr.mxu0 0.0
        %877 = vmatpush1.msra.mxu0 0.0
        %878 = vmatprep.subr.mxu0 0.0
        %879 = vmatpush1.msra.mxu0 0.0
        %880 = vmatprep.subr.mxu0 0.0
        %881 = vmatpush1.msra.mxu0 0.0
        %882 = vmatprep.subr.mxu0 0.0
        %883 = vmatpush1.msra.mxu0 0.0
        %884 = vmatprep.subr.mxu0 0.0
        %885 = vmatpush1.msra.mxu0 0.0
        %886 = vmatprep.mubr.f32.mxu0 0.0
        %v887 = vand.u32 %v651, 4294901760
        %v888 = vsub.f32 %v651, %v887
        %889 = vmatmul.mubr.f32.gmra.mrb[0].mxu0 %v888
        %v890 = vpop.f32.mrb[0].mxu0
        %v891 = vadd.f32 %v814, %v890
        %v892 = vpop.f32.mrb[0].mxu0
        %v893 = vadd.f32 %v816, %v892
        %894 = vdwg.mxu0
        %v895 = vand.u32 %v656, 4294901760
        %896 = vmatprep.subr.mxu0 %v895
        %v897 = vand.u32 %v654, 4294901760
        %898 = vmatpush1.msra.mxu0 %v897
        %899 = vmatprep.subr.mxu0 0.0
        %900 = vmatpush1.msra.mxu0 0.0
        %901 = vmatprep.subr.mxu0 0.0
        %902 = vmatpush1.msra.mxu0 0.0
        %903 = vmatprep.subr.mxu0 0.0
        %904 = vmatpush1.msra.mxu0 0.0
        %905 = vmatprep.subr.mxu0 0.0
        %906 = vmatpush1.msra.mxu0 0.0
        %907 = vmatprep.subr.mxu0 0.0
        %908 = vmatpush1.msra.mxu0 0.0
        %909 = vmatprep.subr.mxu0 0.0
        %910 = vmatpush1.msra.mxu0 0.0
        %911 = vmatprep.subr.mxu0 0.0
        %912 = vmatpush1.msra.mxu0 0.0
        %913 = vmatprep.subr.mxu0 0.0
        %914 = vmatpush1.msra.mxu0 0.0
        %915 = vmatprep.subr.mxu0 0.0
        %916 = vmatpush1.msra.mxu0 0.0
        %917 = vmatprep.subr.mxu0 0.0
        %918 = vmatpush1.msra.mxu0 0.0
        %919 = vmatprep.subr.mxu0 0.0
        %920 = vmatpush1.msra.mxu0 0.0
        %921 = vmatprep.subr.mxu0 0.0
        %922 = vmatpush1.msra.mxu0 0.0
        %923 = vmatprep.subr.mxu0 0.0
        %924 = vmatpush1.msra.mxu0 0.0
        %925 = vmatprep.subr.mxu0 0.0
        %926 = vmatpush1.msra.mxu0 0.0
        %927 = vmatprep.subr.mxu0 0.0
        %928 = vmatpush1.msra.mxu0 0.0
        %929 = vmatprep.subr.mxu0 0.0
        %930 = vmatpush1.msra.mxu0 0.0
        %931 = vmatprep.subr.mxu0 0.0
        %932 = vmatpush1.msra.mxu0 0.0
        %933 = vmatprep.subr.mxu0 0.0
        %934 = vmatpush1.msra.mxu0 0.0
        %935 = vmatprep.subr.mxu0 0.0
        %936 = vmatpush1.msra.mxu0 0.0
        %937 = vmatprep.subr.mxu0 0.0
        %938 = vmatpush1.msra.mxu0 0.0
        %939 = vmatprep.subr.mxu0 0.0
        %940 = vmatpush1.msra.mxu0 0.0
        %941 = vmatprep.subr.mxu0 0.0
        %942 = vmatpush1.msra.mxu0 0.0
        %943 = vmatprep.subr.mxu0 0.0
        %944 = vmatpush1.msra.mxu0 0.0
        %945 = vmatprep.subr.mxu0 0.0
        %946 = vmatpush1.msra.mxu0 0.0
        %947 = vmatprep.subr.mxu0 0.0
        %948 = vmatpush1.msra.mxu0 0.0
        %949 = vmatprep.subr.mxu0 0.0
        %950 = vmatpush1.msra.mxu0 0.0
        %951 = vmatprep.subr.mxu0 0.0
        %952 = vmatpush1.msra.mxu0 0.0
        %953 = vmatprep.subr.mxu0 0.0
        %954 = vmatpush1.msra.mxu0 0.0
        %955 = vmatprep.subr.mxu0 0.0
        %956 = vmatpush1.msra.mxu0 0.0
        %957 = vmatprep.subr.mxu0 0.0
        %958 = vmatpush1.msra.mxu0 0.0
        %959 = vmatprep.subr.mxu0 0.0
        %960 = vmatpush1.msra.mxu0 0.0
        %961 = vmatprep.mubr.f32.mxu0 0.0
        %v962 = vand.u32 %v651, 4294901760
        %v963 = vsub.f32 %v651, %v962
        %v964 = vand.u32 %v963, 4294901760
        %965 = vmatmul.mubr.f32.gmra.mrb[0].mxu0 %v964
        %v966 = vpop.f32.mrb[0].mxu0
        %v967 = vadd.f32 %v891, %v966
        %v968 = vpop.f32.mrb[0].mxu0
        %v969 = vadd.f32 %v893, %v968
        %970 = vdwg.mxu0
        %v971 = vand.u32 %v656, 4294901760
        %v972 = vsub.f32 %v656, %v971
        %v973 = vand.u32 %v972, 4294901760
        %974 = vmatprep.subr.mxu0 %v973
        %v975 = vand.u32 %v654, 4294901760
        %v976 = vsub.f32 %v654, %v975
        %v977 = vand.u32 %v976, 4294901760
        %978 = vmatpush1.msra.mxu0 %v977
        %979 = vmatprep.subr.mxu0 0.0
        %980 = vmatpush1.msra.mxu0 0.0
        %981 = vmatprep.subr.mxu0 0.0
        %982 = vmatpush1.msra.mxu0 0.0
        %983 = vmatprep.subr.mxu0 0.0
        %984 = vmatpush1.msra.mxu0 0.0
        %985 = vmatprep.subr.mxu0 0.0
        %986 = vmatpush1.msra.mxu0 0.0
        %987 = vmatprep.subr.mxu0 0.0
        %988 = vmatpush1.msra.mxu0 0.0
        %989 = vmatprep.subr.mxu0 0.0
        %990 = vmatpush1.msra.mxu0 0.0
        %991 = vmatprep.subr.mxu0 0.0
        %992 = vmatpush1.msra.mxu0 0.0
        %993 = vmatprep.subr.mxu0 0.0
        %994 = vmatpush1.msra.mxu0 0.0
        %995 = vmatprep.subr.mxu0 0.0
        %996 = vmatpush1.msra.mxu0 0.0
        %997 = vmatprep.subr.mxu0 0.0
        %998 = vmatpush1.msra.mxu0 0.0
        %999 = vmatprep.subr.mxu0 0.0
        %1000 = vmatpush1.msra.mxu0 0.0
        %1001 = vmatprep.subr.mxu0 0.0
        %1002 = vmatpush1.msra.mxu0 0.0
        %1003 = vmatprep.subr.mxu0 0.0
        %1004 = vmatpush1.msra.mxu0 0.0
        %1005 = vmatprep.subr.mxu0 0.0
        %1006 = vmatpush1.msra.mxu0 0.0
        %1007 = vmatprep.subr.mxu0 0.0
        %1008 = vmatpush1.msra.mxu0 0.0
        %1009 = vmatprep.subr.mxu0 0.0
        %1010 = vmatpush1.msra.mxu0 0.0
        %1011 = vmatprep.subr.mxu0 0.0
        %1012 = vmatpush1.msra.mxu0 0.0
        %1013 = vmatprep.subr.mxu0 0.0
        %1014 = vmatpush1.msra.mxu0 0.0
        %1015 = vmatprep.subr.mxu0 0.0
        %1016 = vmatpush1.msra.mxu0 0.0
        %1017 = vmatprep.subr.mxu0 0.0
        %1018 = vmatpush1.msra.mxu0 0.0
        %1019 = vmatprep.subr.mxu0 0.0
        %1020 = vmatpush1.msra.mxu0 0.0
        %1021 = vmatprep.subr.mxu0 0.0
        %1022 = vmatpush1.msra.mxu0 0.0
        %1023 = vmatprep.subr.mxu0 0.0
        %1024 = vmatpush1.msra.mxu0 0.0
        %1025 = vmatprep.subr.mxu0 0.0
        %1026 = vmatpush1.msra.mxu0 0.0
        %1027 = vmatprep.subr.mxu0 0.0
        %1028 = vmatpush1.msra.mxu0 0.0
        %1029 = vmatprep.subr.mxu0 0.0
        %1030 = vmatpush1.msra.mxu0 0.0
        %1031 = vmatprep.subr.mxu0 0.0
        %1032 = vmatpush1.msra.mxu0 0.0
        %1033 = vmatprep.subr.mxu0 0.0
        %1034 = vmatpush1.msra.mxu0 0.0
        %1035 = vmatprep.subr.mxu0 0.0
        %1036 = vmatpush1.msra.mxu0 0.0
        %1037 = vmatprep.subr.mxu0 0.0
        %1038 = vmatpush1.msra.mxu0 0.0
        %1039 = vmatprep.subr.mxu0 0.0
        %1040 = vmatpush1.msra.mxu0 0.0
        %1041 = vmatprep.mubr.f32.mxu0 0.0
        %v1042 = vand.u32 %v651, 4294901760
        %1043 = vmatmul.mubr.f32.gmra.mrb[0].mxu0 %v1042
        %v1044 = vpop.f32.mrb[0].mxu0
        %v1045 = vadd.f32 %v967, %v1044
        %v1046 = vpop.f32.mrb[0].mxu0
        %v1047 = vadd.f32 %v969, %v1046
        %1048 = vdwg.mxu0
        %v1049 = vand.u32 %v656, 4294901760
        %1050 = vmatprep.subr.mxu0 %v1049
        %v1051 = vand.u32 %v654, 4294901760
        %1052 = vmatpush1.msra.mxu0 %v1051
        %1053 = vmatprep.subr.mxu0 0.0
        %1054 = vmatpush1.msra.mxu0 0.0
        %1055 = vmatprep.subr.mxu0 0.0
        %1056 = vmatpush1.msra.mxu0 0.0
        %1057 = vmatprep.subr.mxu0 0.0
        %1058 = vmatpush1.msra.mxu0 0.0
        %1059 = vmatprep.subr.mxu0 0.0
        %1060 = vmatpush1.msra.mxu0 0.0
        %1061 = vmatprep.subr.mxu0 0.0
        %1062 = vmatpush1.msra.mxu0 0.0
        %1063 = vmatprep.subr.mxu0 0.0
        %1064 = vmatpush1.msra.mxu0 0.0
        %1065 = vmatprep.subr.mxu0 0.0
        %1066 = vmatpush1.msra.mxu0 0.0
        %1067 = vmatprep.subr.mxu0 0.0
        %1068 = vmatpush1.msra.mxu0 0.0
        %1069 = vmatprep.subr.mxu0 0.0
        %1070 = vmatpush1.msra.mxu0 0.0
        %1071 = vmatprep.subr.mxu0 0.0
        %1072 = vmatpush1.msra.mxu0 0.0
        %1073 = vmatprep.subr.mxu0 0.0
        %1074 = vmatpush1.msra.mxu0 0.0
        %1075 = vmatprep.subr.mxu0 0.0
        %1076 = vmatpush1.msra.mxu0 0.0
        %1077 = vmatprep.subr.mxu0 0.0
        %1078 = vmatpush1.msra.mxu0 0.0
        %1079 = vmatprep.subr.mxu0 0.0
        %1080 = vmatpush1.msra.mxu0 0.0
        %1081 = vmatprep.subr.mxu0 0.0
        %1082 = vmatpush1.msra.mxu0 0.0
        %1083 = vmatprep.subr.mxu0 0.0
        %1084 = vmatpush1.msra.mxu0 0.0
        %1085 = vmatprep.subr.mxu0 0.0
        %1086 = vmatpush1.msra.mxu0 0.0
        %1087 = vmatprep.subr.mxu0 0.0
        %1088 = vmatpush1.msra.mxu0 0.0
        %1089 = vmatprep.subr.mxu0 0.0
        %1090 = vmatpush1.msra.mxu0 0.0
        %1091 = vmatprep.subr.mxu0 0.0
        %1092 = vmatpush1.msra.mxu0 0.0
        %1093 = vmatprep.subr.mxu0 0.0
        %1094 = vmatpush1.msra.mxu0 0.0
        %1095 = vmatprep.subr.mxu0 0.0
        %1096 = vmatpush1.msra.mxu0 0.0
        %1097 = vmatprep.subr.mxu0 0.0
        %1098 = vmatpush1.msra.mxu0 0.0
        %1099 = vmatprep.subr.mxu0 0.0
        %1100 = vmatpush1.msra.mxu0 0.0
        %1101 = vmatprep.subr.mxu0 0.0
        %1102 = vmatpush1.msra.mxu0 0.0
        %1103 = vmatprep.subr.mxu0 0.0
        %1104 = vmatpush1.msra.mxu0 0.0
        %1105 = vmatprep.subr.mxu0 0.0
        %1106 = vmatpush1.msra.mxu0 0.0
        %1107 = vmatprep.subr.mxu0 0.0
        %1108 = vmatpush1.msra.mxu0 0.0
        %1109 = vmatprep.subr.mxu0 0.0
        %1110 = vmatpush1.msra.mxu0 0.0
        %1111 = vmatprep.subr.mxu0 0.0
        %1112 = vmatpush1.msra.mxu0 0.0
        %1113 = vmatprep.subr.mxu0 0.0
        %1114 = vmatpush1.msra.mxu0 0.0
        %1115 = vmatprep.mubr.f32.mxu0 0.0
        %v1116 = vand.u32 %v651, 4294901760
        %1117 = vmatmul.mubr.f32.gmra.mrb[0].mxu0 %v1116
        %v1118 = vpop.f32.mrb[0].mxu0
        %v1119 = vadd.f32 %v1045, %v1118
        %v1120 = vpop.f32.mrb[0].mxu0
        %v1121 = vadd.f32 %v1047, %v1120
        %1122 = vdwg.mxu0
        %s1123 = sld [smem:[#allocation2]]
        %v1124 = vstv %s1123
        %v1125 = vmul.f32 %v1124, %v1119
        %v1126 = vmul.f32 %v1124, %v1121
        %v1127 = vadd.f32 %v1125, %v161
        %v1128 = vadd.f32 %v1126, %v163
        %v1131 = vcombine.low %v1127, %v1128
        %1133 = vst [vmem:[%s160] sm:$0xff] %v1131
        %s1134 = sand.u32 %s75, 1
        %s1135 = scalar_lea.sflag [#allocation5], %s1134
        %s1136 = sand.u32 %s75, 1
        %s1137 = smul.addr %s1136, 8
        %s1138 = scalar_lea.vmem [#allocation6], %s1137
        // Predicated region
        $region33: #{tpu_custom_call.1} parent=27 // pred_check
          %p1139 = pneg %p85
        $region34: #{tpu_custom_call.1} parent=27 // pred_check_branch
          %1141 = sbr.rel (%p1139) target = $region36
        $region35: #{tpu_custom_call.1} parent=27 // pred_region
          %s1143 = ssub.s32 128, 128
          %1144 = vsyncadd %s1135, %s1143
          %s1145 = smul.addr %s20, 2
          %s1146 = smul.addr %s1145, 64
          %s1147 = scalar_lea.hbm %s2, %s1146
          %s1149 = sshll.u32 %s1138, 4
          %s1150 = int_to_ptr.vmem [resolvable:$true] %s1149
          %1152 = dma.vmem_to_hbm [thread:$0]  %s1150, 128, %s1147, %s1135
        $region36: #{tpu_custom_call.1} parent=27 // pred_fallthru
          _
      $region28: #{tpu_custom_call.1} parent=5 // pred_fallthru
        _
      %p1153 = scmp.le.s32.totalorder 2, %s15
      // Predicated region
      $region37: #{tpu_custom_call.1} parent=5 // pred_check
        %p1154 = pneg %p1153
      $region38: #{tpu_custom_call.1} parent=5 // pred_check_branch
        %1156 = sbr.rel (%p1154) target = $region40
      $region39: #{tpu_custom_call.1} parent=5 // pred_region
        %s1157 = ssub.s32 %s15, 2
        // Predicated region
        $region41: #{tpu_custom_call.1} parent=39 // pred_check
          %p1158 = pneg %p91
        $region42: #{tpu_custom_call.1} parent=39 // pred_check_branch
          %1160 = sbr.rel (%p1158) target = $region44
        $region43: #{tpu_custom_call.1} parent=39 // pred_region
          %s1161 = sand.u32 %s76, 1
          %s1162 = scalar_lea.sflag [#allocation5], %s1161
          %s1163 = sand.u32 %s76, 1
          %s1164 = smul.addr %s1163, 8
          %s1165 = scalar_lea.vmem [#allocation6], %s1164
          %1166 = dma.done %s1162, 128
        $region44: #{tpu_custom_call.1} parent=39 // pred_fallthru
          _
      $region40: #{tpu_custom_call.1} parent=5 // pred_fallthru
        _
    $region6: #{tpu_custom_call.1} parent=1 // loop_footer
      %s19 = sadd.s32 1, %s15
    $region7: #{tpu_custom_call.1} parent=1 // loop_footer_branch
      %14 = sbr.rel target = $region3
    $region8: #{tpu_custom_call.1} parent=1 // loop_exit
      _
    %1167 = vsyncpa [#allocation4], 1
    %s1168 = scalar_lea.sflag [#allocation4], 1
    %1169 = vsyncpa %s1168, 1
    %1170 = vsyncpa [#allocation5], 1
    %s1171 = scalar_lea.sflag [#allocation5], 1
    %1172 = vsyncpa %s1171, 1

</llo_original>
